<compile_context>
chip_gen: v6e
topology: v6e:2x2x1
jax: 0.10.0
libtpu: 0.0.40
codegen_flags: <defaults>
</compile_context>

<pallas_src>
import jax
import jax.numpy as jnp
import numpy as np
from jax.experimental import pallas as pl
from jax.experimental.pallas import tpu as pltpu


def _yolo_decode_kernel(pred_ref, scale_ref, off_ref, out_ref):
    """Decode one (batch-tile, anchor) block, lane-dense (spatial on lanes).

    pred_ref  : VMEM (bt, A, G2)  raw predictions for one anchor.
    scale_ref : VMEM (A, 1)       per-attribute scale [stride, stride, aw, ah, 1, ...].
    off_ref   : VMEM (A, G2)      grid offsets: row0 = grid_x, row1 = grid_y, rest 0.
    out_ref   : VMEM (bt, A, G2)  decoded output, same layout as the input.
    """
    p = pred_ref[...]                                   # (bt, A, G2)
    scale = scale_ref[...]                              # (A, 1)
    off = off_ref[...]                                  # (A, G2)

    # Attribute index == sublane index inside an anchor block (no div/mod needed).
    attr = jax.lax.broadcasted_iota(jnp.int32, (scale.shape[0], 1), 0)   # (A, 1)
    use_exp = jnp.logical_or(attr == 2, attr == 3)      # w/h rows

    # Single EUP pass: exp(p) on w/h rows, exp(-p) elsewhere; sigmoid(p) = 1/(1+exp(-p)).
    # Keep these as selects (not arithmetic blends) so any overflow stays inert.
    t = jnp.where(use_exp, p, -p)
    e = jnp.exp(t)
    val = jnp.where(use_exp, e, 1.0 / (1.0 + e))

    out_ref[...] = (val + off) * scale                  # (bt, A, G2), full-tile store


def yolo_layer_forward(x, anchors, num_classes, img_dim, *, batch_tile=None):
    """Inference forward of YOLOLayer (targets=None path).

    x: (bs, num_anchors*(5+num_classes), g, g) float32 (NCHW, like PyTorch).
    Returns: (bs, num_anchors*g*g, 5+num_classes) float32.
    """
    bs, c, g, g2_ = x.shape
    assert g == g2_
    na = len(anchors)
    A = 5 + num_classes
    assert c == na * A
    stride = float(img_dim) / float(g)
    G2 = g * g

    # --- glue: NCHW -> (bs, na, A, g*g) is a free, contiguous reshape; spatial stays
    # on the lane axis. No padding: block dims equal to the full dims handle G2 != 128k.
    pred = x.astype(jnp.float32).reshape(bs, na, A, G2)

    # Per-attribute scale column (tiny): x/y rows -> stride; w/h rows -> raw anchor
    # w/h ((anchor/stride) * stride cancels); conf/cls rows -> 1.
    anc = np.asarray(anchors, dtype=np.float32).reshape(na, 2)
    scale = np.ones((na, A, 1), dtype=np.float32)
    scale[:, 0, 0] = stride
    scale[:, 1, 0] = stride
    scale[:, 2, 0] = anc[:, 0]
    scale[:, 3, 0] = anc[:, 1]
    scale = jnp.asarray(scale)

    # Grid-cell offsets precomputed once (no per-element int div/mod by g in-kernel).
    lin = np.arange(G2, dtype=np.int64)
    off = np.zeros((A, G2), dtype=np.float32)
    off[0] = (lin % g).astype(np.float32)   # grid_x
    off[1] = (lin // g).astype(np.float32)  # grid_y
    off = jnp.asarray(off)

    # Batch tile: amortize the ~0.35 us per-grid-step overhead while keeping
    # in+out double-buffers comfortably inside the scoped VMEM limit on all gens.
    block_bytes = A * G2 * 4
    if batch_tile is None:
        per_buffer_budget = 8 * 1024 * 1024          # x4 live buffers (in+out, depth 2)
        batch_tile = max(1, min(bs, per_buffer_budget // max(block_bytes, 1), 8))
    bt = int(max(1, min(batch_tile, bs)))
    while bs % bt:                                   # keep blocks exact (no ragged edge)
        bt -= 1

    grid = (bs // bt, na)

    out = pl.pallas_call(
        _yolo_decode_kernel,
        out_shape=jax.ShapeDtypeStruct((bs, na, A, G2), jnp.float32),
        grid=grid,
        in_specs=[
            pl.BlockSpec((bt, None, A, G2), lambda b, a: (b, a, 0, 0)),  # pred
            pl.BlockSpec((None, A, 1), lambda b, a: (a, 0, 0)),          # per-anchor scale
            pl.BlockSpec((A, G2), lambda b, a: (0, 0)),                  # grid offsets (const)
        ],
        out_specs=pl.BlockSpec((bt, None, A, G2), lambda b, a: (b, a, 0, 0)),
        compiler_params=pltpu.CompilerParams(
            # Both grid axes are independent -> shards across both TensorCores on v7x
            # (anchor axis covers the bs == 1 inference case); no-op on v5e/v6e.
            dimension_semantics=("parallel", "parallel"),
        ),
    )(pred, scale, off)

    # --- glue: one XLA permute to the PyTorch row layout (bs, na*g*g, 5+nc).
    return out.transpose(0, 1, 3, 2).reshape(bs, na * G2, A)


def yolo_layer_ref(x, anchors, num_classes, img_dim):
    """Pure-JAX reference mirroring the PyTorch forward exactly."""
    bs, c, g, _ = x.shape
    na = len(anchors)
    A = 5 + num_classes
    stride = float(img_dim) / float(g)
    pred = x.reshape(bs, na, A, g, g).transpose(0, 1, 3, 4, 2)  # (bs,na,g,g,A)
    sx = jax.nn.sigmoid(pred[..., 0])
    sy = jax.nn.sigmoid(pred[..., 1])
    w = pred[..., 2]
    h = pred[..., 3]
    conf = jax.nn.sigmoid(pred[..., 4])
    cls = jax.nn.sigmoid(pred[..., 5:])
    grid_x = jnp.broadcast_to(jnp.arange(g, dtype=jnp.float32)[None, :], (g, g))
    grid_y = grid_x.T
    anc = jnp.array(anchors, dtype=jnp.float32) / stride
    aw = anc[:, 0].reshape(1, na, 1, 1)
    ah = anc[:, 1].reshape(1, na, 1, 1)
    boxes = jnp.stack(
        [sx + grid_x, sy + grid_y, jnp.exp(w) * aw, jnp.exp(h) * ah], axis=-1
    )
    return jnp.concatenate(
        [
            boxes.reshape(bs, -1, 4) * stride,
            conf.reshape(bs, -1, 1),
            cls.reshape(bs, -1, num_classes),
        ],
        axis=-1,
    )


# TODO(synk): the training branch (targets is not None) relies on build_targets /
# BCE+MSE losses; it is not part of this inference kernel.

if __name__ == "__main__":
    num_classes = 3
    anchors = [(10.0, 13.0), (16.0, 30.0), (33.0, 23.0)]
    na = len(anchors)
    C = na * (5 + num_classes)
    key = jax.random.PRNGKey(0)

    # Case 1: small, 128-aligned grid (g=16 -> g*g=256).
    bs, g, img_dim = 2, 16, 64
    x = jax.random.normal(key, (bs, C, g, g), dtype=jnp.float32)
    out = jax.block_until_ready(yolo_layer_forward(x, anchors, num_classes, img_dim))
    ref = jax.block_until_ready(yolo_layer_ref(x, anchors, num_classes, img_dim))
    assert out.shape == (bs, na * g * g, 5 + num_classes)
    np.testing.assert_allclose(np.asarray(out), np.asarray(ref), rtol=1e-5, atol=1e-5)

    # Case 2: non-aligned real-YOLO-style grid (g=13 -> g*g=169, no pad/slice now).
    bs, g, img_dim = 2, 13, 52
    x2 = jax.random.normal(jax.random.PRNGKey(1), (bs, C, g, g), dtype=jnp.float32)
    out2 = jax.block_until_ready(yolo_layer_forward(x2, anchors, num_classes, img_dim))
    ref2 = jax.block_until_ready(yolo_layer_ref(x2, anchors, num_classes, img_dim))
    assert out2.shape == (bs, na * g * g, 5 + num_classes)
    np.testing.assert_allclose(np.asarray(out2), np.asarray(ref2), rtol=1e-5, atol=1e-5)

    print("KERNEL_OK")
</pallas_src>

<mosaic_0001>
module attributes {stable_mosaic.version = 11 : i64} {
  func.func @_yolo_decode_kernel(%arg0: i32, %arg1: i32, %arg2: memref<2x1x8x256xf32, #tpu.memory_space<vmem>>, %arg3: memref<1x8x1xf32, #tpu.memory_space<vmem>>, %arg4: memref<8x256xf32, #tpu.memory_space<vmem>>, %arg5: memref<2x1x8x256xf32, #tpu.memory_space<vmem>>) attributes {dimension_semantics = [#tpu.dimension_semantics<parallel>, #tpu.dimension_semantics<parallel>], iteration_bounds = array<i64: 1, 3>, scalar_prefetch = 0 : i64, scratch_operands = 0 : i64, tpu.core_type = #tpu.core_type<tc>, window_params = [{transform_indices = @transform_0, window_bounds = array<i64: 2, 1, 8, 256>}, {transform_indices = @transform_1, window_bounds = array<i64: 1, 8, 1>}, {pipeline_mode = #tpu.pipeline_mode<synchronous>, transform_indices = @transform_2, window_bounds = array<i64: 8, 256>}, {transform_indices = @transform_3, window_bounds = array<i64: 2, 1, 8, 256>}]} {
    %c0 = arith.constant 0 : index
    %c0_0 = arith.constant 0 : index
    %c0_1 = arith.constant 0 : index
    %c0_2 = arith.constant 0 : index
    %0 = vector.load %arg2[%c0, %c0_0, %c0_1, %c0_2] : memref<2x1x8x256xf32, #tpu.memory_space<vmem>>, vector<2x1x8x256xf32>
    %1 = vector.shape_cast %0 : vector<2x1x8x256xf32> to vector<2x8x256xf32>
    %c0_3 = arith.constant 0 : index
    %c0_4 = arith.constant 0 : index
    %c0_5 = arith.constant 0 : index
    %2 = vector.load %arg3[%c0_3, %c0_4, %c0_5] : memref<1x8x1xf32, #tpu.memory_space<vmem>>, vector<1x8x1xf32>
    %3 = vector.shape_cast %2 : vector<1x8x1xf32> to vector<8x1xf32>
    %c0_6 = arith.constant 0 : index
    %c0_7 = arith.constant 0 : index
    %4 = vector.load %arg4[%c0_6, %c0_7] : memref<8x256xf32, #tpu.memory_space<vmem>>, vector<8x256xf32>
    %5 = tpu.iota {dimensions = array<i32: 0>} : vector<8x1xi32>
    %c2_i32 = arith.constant 2 : i32
    %6 = vector.broadcast %c2_i32 : i32 to vector<8x1xi32>
    %7 = arith.cmpi eq, %5, %6 : vector<8x1xi32>
    %c3_i32 = arith.constant 3 : i32
    %8 = vector.broadcast %c3_i32 : i32 to vector<8x1xi32>
    %9 = arith.cmpi eq, %5, %8 : vector<8x1xi32>
    %10 = arith.ori %7, %9 : vector<8x1xi1>
    %cst = arith.constant 0.000000e+00 : f32
    %11 = vector.broadcast %cst : f32 to vector<2x8x256xf32>
    %12 = arith.subf %11, %1 : vector<2x8x256xf32>
    %13 = vector.shape_cast %10 : vector<8x1xi1> to vector<1x8x1xi1>
    %14 = vector.broadcast %13 : vector<1x8x1xi1> to vector<2x8x256xi1>
    %15 = arith.select %14, %1, %12 : vector<2x8x256xi1>, vector<2x8x256xf32>
    %16 = math.exp %15 : vector<2x8x256xf32>
    %cst_8 = arith.constant 1.000000e+00 : f32
    %17 = vector.broadcast %cst_8 : f32 to vector<2x8x256xf32>
    %18 = arith.addf %17, %16 : vector<2x8x256xf32>
    %cst_9 = arith.constant 1.000000e+00 : f32
    %19 = vector.broadcast %cst_9 : f32 to vector<2x8x256xf32>
    %20 = arith.divf %19, %18 : vector<2x8x256xf32>
    %21 = vector.shape_cast %10 : vector<8x1xi1> to vector<1x8x1xi1>
    %22 = vector.broadcast %21 : vector<1x8x1xi1> to vector<2x8x256xi1>
    %23 = arith.select %22, %16, %20 : vector<2x8x256xi1>, vector<2x8x256xf32>
    %24 = vector.shape_cast %4 : vector<8x256xf32> to vector<1x8x256xf32>
    %25 = vector.broadcast %24 : vector<1x8x256xf32> to vector<2x8x256xf32>
    %26 = arith.addf %23, %25 : vector<2x8x256xf32>
    %27 = vector.shape_cast %3 : vector<8x1xf32> to vector<1x8x1xf32>
    %28 = vector.broadcast %27 : vector<1x8x1xf32> to vector<2x8x256xf32>
    %29 = arith.mulf %26, %28 : vector<2x8x256xf32>
    %c0_10 = arith.constant 0 : index
    %c0_11 = arith.constant 0 : index
    %c0_12 = arith.constant 0 : index
    %c0_13 = arith.constant 0 : index
    %30 = vector.load %arg5[%c0_10, %c0_11, %c0_12, %c0_13] : memref<2x1x8x256xf32, #tpu.memory_space<vmem>>, vector<2x1x8x256xf32>
    %31 = vector.shape_cast %30 : vector<2x1x8x256xf32> to vector<2x8x256xf32>
    %32 = vector.shape_cast %29 : vector<2x8x256xf32> to vector<2x1x8x256xf32>
    tpu.vector_store %arg5[%c0_10, %c0_11, %c0_12, %c0_13], %32 {strides = array<i32>} : memref<2x1x8x256xf32, #tpu.memory_space<vmem>>, vector<2x1x8x256xf32>,
    return
  }
  func.func @transform_0(%arg0: i32, %arg1: i32) -> (i32, i32, i32, i32) {
    %c0_i32 = arith.constant 0 : i32
    %c0_i32_0 = arith.constant 0 : i32
    %c0_i32_1 = arith.constant 0 : i32
    return %arg0, %arg1, %c0_i32, %c0_i32_0 : i32, i32, i32, i32
  }
  func.func @transform_1(%arg0: i32, %arg1: i32) -> (i32, i32, i32) {
    %c0_i32 = arith.constant 0 : i32
    %c0_i32_0 = arith.constant 0 : i32
    %c0_i32_1 = arith.constant 0 : i32
    return %arg1, %c0_i32, %c0_i32_0 : i32, i32, i32
  }
  func.func @transform_2(%arg0: i32, %arg1: i32) -> (i32, i32) {
    %c0_i32 = arith.constant 0 : i32
    %c0_i32_0 = arith.constant 0 : i32
    %c0_i32_1 = arith.constant 0 : i32
    return %c0_i32, %c0_i32_0 : i32, i32
  }
  func.func @transform_3(%arg0: i32, %arg1: i32) -> (i32, i32, i32, i32) {
    %c0_i32 = arith.constant 0 : i32
    %c0_i32_0 = arith.constant 0 : i32
    %c0_i32_1 = arith.constant 0 : i32
    return %arg0, %arg1, %c0_i32, %c0_i32_0 : i32, i32, i32, i32
  }
}

</mosaic_0001>

<llo_original>
// kernel: tpu_custom_call.1
$region0: #{tpu_custom_call.1}
  #allocation0 [shape = 'u32[]', space=smem, size = 0x4, offset = 0x4, fixed_abs, tag = 'smem constant byte address 0x4 - core index']
  #allocation1 [shape = 'u32[144,128]{1,0:T(1,128)}', space=vmem, size = 0x12000, scoped, tag = 'internal scratch']
  %s0 = inlined_call_operand.hbm [shape: f32[2,3,8,256], index: 0, kind: input, shape index: {}]
  %s1 = inlined_call_operand.vmem [shape: f32[3,8,1], index: 1, kind: input, shape index: {}]
  %s2 = inlined_call_operand.vmem [shape: f32[8,256], index: 2, kind: input, shape index: {}]
  %s3 = inlined_call_operand.hbm [shape: f32[2,3,8,256], index: 3, kind: output, shape index: {}]
  %s4 = sld [smem:[#allocation0]]
  $region49: #{tpu_custom_call.1} parent=0
    _
  %s6 = ssub.s32 1, %s4
  %s7 = scalar_select 0, %s6, %s4
  $region1: #{tpu_custom_call.1} parent=0
    #allocation2 [shape = 'u8[32768]{0}', space=vmem, size = 0x8000, scoped, tag = 'input window, operand 0']
    #allocation3 [shape = 's32[2]{0}', space=sflag, size = 0x8, scoped, tag = 'scoped memory for tpu_custom_call.1']
    #allocation4 [shape = 's32[2]{0}', space=sflag, size = 0x8, scoped, tag = 'scoped memory for tpu_custom_call.1']
    #allocation5 [shape = 'u8[32768]{0}', space=vmem, size = 0x8000, scoped, tag = 'output window, operand 0']
    %8 = vsyncpa [#allocation3], 0
    %s9 = scalar_lea.sflag [#allocation3], 1
    %10 = vsyncpa %s9, 0
    %11 = vsyncpa [#allocation4], 0
    %s12 = scalar_lea.sflag [#allocation4], 1
    %13 = vsyncpa %s12, 0
    loop: start=0, step=1, limit=5
    $region2: #{tpu_custom_call.1} parent=1 // loop_pre_header
      _
    $region3: #{tpu_custom_call.1} parent=1 // loop_header
      %s15 = sphi 0, %s19
      %p16 = scmp.ge.s32.totalorder %s15, 5
      %s22 = sphi 0, %s34
      %s23 = sphi 0, %s30
      %s24 = sphi 0, %s22
      %s25 = sphi 0, %s23
      %s26 = sphi 0, %s24
      %s27 = sphi 0, %s25
      %s39 = sphi 0, %s41
      %s42 = sphi 0, %s39
      %s43 = sphi 0, %s42
      %s59 = sphi 0, %s43
      %s65 = sphi 0, %s67
      %s68 = sphi 0, %s65
      %s69 = sphi 0, %s68
      %s85 = sphi 0, %s69
      %s89 = sphi 0, %s89
      %s91 = sphi 0, %s89
      %s92 = sphi 0, %s91
      %s106 = sphi 0, %s92
      %s114 = sphi 0, %s116
      %s117 = sphi 0, %s114
      %s118 = sphi 0, %s117
      %s134 = sphi 0, %s118
    $region4: #{tpu_custom_call.1} parent=1 // loop_header_branch
      %18 = sbr.rel (%p16) target = $region8
    $region5: #{tpu_custom_call.1} parent=1 // loop_body
      %s20 = ssub.s32 %s15, 1
      %s21 = ssub.s32 %s15, 2
      %s28 = sadd.s32 1, %s23
      %p29 = scmp.ge.s32.totalorder %s28, 3
      %s30 = scalar_select %p29, 0, %s28
      %s31 = sadd.s32 1, %s22
      %s32 = scalar_select %p29, %s31, %s22
      %p33 = scmp.ge.s32.totalorder %s32, 1
      %s34 = scalar_select %p33, 0, %s32
      %s35 = ssub.s32 %s22, %s34
      %s36 = ssub.s32 %s23, %s30
      %s37 = sor.u32 %s35, %s36
      %p38 = scmp.eq.s32.totalorder %s37, 0
      %s40 = sadd.s32 %s39, 1
      %s41 = scalar_select %p38, %s39, %s40
      %p44 = pneg %p38
      %p45 = scmp.eq.s32.totalorder %s15, 2
      %p46 = por %p44, %p45
      %p47 = scmp.ne.s32.totalorder %s39, %s42
      %p48 = scmp.eq.s32.totalorder %s15, 0
      %p49 = por %p47, %p48
      %p50 = scmp.ne.s32.totalorder %s39, %s42
      %p51 = scmp.eq.s32.totalorder %s20, 2
      %p52 = por %p50, %p51
      %p53 = scmp.ne.s32.totalorder %s42, %s43
      %p54 = scmp.eq.s32.totalorder %s20, 0
      %p55 = por %p53, %p54
      %p56 = scmp.ne.s32.totalorder %s42, %s43
      %p57 = scmp.eq.s32.totalorder %s21, 2
      %p58 = por %p56, %p57
      %p60 = scmp.ne.s32.totalorder %s43, %s59
      %p61 = scmp.eq.s32.totalorder %s21, 0
      %p62 = por %p60, %p61
      %s63 = ssub.s32 %s23, %s30
      %p64 = scmp.eq.s32.totalorder %s63, 0
      %s66 = sadd.s32 %s65, 1
      %s67 = scalar_select %p64, %s65, %s66
      %p70 = pneg %p64
      %p71 = scmp.eq.s32.totalorder %s15, 2
      %p72 = por %p70, %p71
      %p73 = scmp.ne.s32.totalorder %s65, %s68
      %p74 = scmp.eq.s32.totalorder %s15, 0
      %p75 = por %p73, %p74
      %p76 = scmp.ne.s32.totalorder %s65, %s68
      %p77 = scmp.eq.s32.totalorder %s20, 2
      %p78 = por %p76, %p77
      %p79 = scmp.ne.s32.totalorder %s68, %s69
      %p80 = scmp.eq.s32.totalorder %s20, 0
      %p81 = por %p79, %p80
      %p82 = scmp.ne.s32.totalorder %s68, %s69
      %p83 = scmp.eq.s32.totalorder %s21, 2
      %p84 = por %p82, %p83
      %p86 = scmp.ne.s32.totalorder %s69, %s85
      %p87 = scmp.eq.s32.totalorder %s21, 0
      %p88 = por %p86, %p87
      %s90 = sadd.s32 %s89, 1
      %p93 = scmp.eq.s32.totalorder %s15, 2
      %p94 = scmp.ne.s32.totalorder %s89, %s91
      %p95 = scmp.eq.s32.totalorder %s15, 0
      %p96 = por %p94, %p95
      %p97 = scmp.ne.s32.totalorder %s89, %s91
      %p98 = scmp.eq.s32.totalorder %s20, 2
      %p99 = por %p97, %p98
      %p100 = scmp.ne.s32.totalorder %s91, %s92
      %p101 = scmp.eq.s32.totalorder %s20, 0
      %p102 = por %p100, %p101
      %p103 = scmp.ne.s32.totalorder %s91, %s92
      %p104 = scmp.eq.s32.totalorder %s21, 2
      %p105 = por %p103, %p104
      %p107 = scmp.ne.s32.totalorder %s92, %s106
      %p108 = scmp.eq.s32.totalorder %s21, 0
      %p109 = por %p107, %p108
      %s110 = ssub.s32 %s22, %s34
      %s111 = ssub.s32 %s23, %s30
      %s112 = sor.u32 %s110, %s111
      %p113 = scmp.eq.s32.totalorder %s112, 0
      %s115 = sadd.s32 %s114, 1
      %s116 = scalar_select %p113, %s114, %s115
      %p119 = pneg %p113
      %p120 = scmp.eq.s32.totalorder %s15, 2
      %p121 = por %p119, %p120
      %p122 = scmp.ne.s32.totalorder %s114, %s117
      %p123 = scmp.eq.s32.totalorder %s15, 0
      %p124 = por %p122, %p123
      %p125 = scmp.ne.s32.totalorder %s114, %s117
      %p126 = scmp.eq.s32.totalorder %s20, 2
      %p127 = por %p125, %p126
      %p128 = scmp.ne.s32.totalorder %s117, %s118
      %p129 = scmp.eq.s32.totalorder %s20, 0
      %p130 = por %p128, %p129
      %p131 = scmp.ne.s32.totalorder %s117, %s118
      %p132 = scmp.eq.s32.totalorder %s21, 2
      %p133 = por %p131, %p132
      %p135 = scmp.ne.s32.totalorder %s118, %s134
      %p136 = scmp.eq.s32.totalorder %s21, 0
      %p137 = por %p135, %p136
      %p138 = scmp.le.s32.totalorder 1, %s15
      %p139 = scmp.lt.s32.totalorder %s15, 4
      %p140 = pnand %p138, %p139
      %p141 = pneg %p140
      // Predicated region
      $region9: #{tpu_custom_call.1} parent=5 // pred_check
        _
      $region10: #{tpu_custom_call.1} parent=5 // pred_check_branch
        %143 = sbr.rel (%p140) target = $region12
      $region11: #{tpu_custom_call.1} parent=5 // pred_region
        %s144 = ssub.s32 %s15, 1
        // Predicated region
        $region13: #{tpu_custom_call.1} parent=11 // pred_check
          %p145 = pneg %p102
        $region14: #{tpu_custom_call.1} parent=11 // pred_check_branch
          %147 = sbr.rel (%p145) target = $region16
        $region15: #{tpu_custom_call.1} parent=11 // pred_region
          _
        $region16: #{tpu_custom_call.1} parent=11 // pred_fallthru
          _
      $region12: #{tpu_custom_call.1} parent=5 // pred_fallthru
        _
      %p148 = scmp.lt.s32.totalorder %s15, 3
      // Predicated region
      $region17: #{tpu_custom_call.1} parent=5 // pred_check
        %p149 = pneg %p148
      $region18: #{tpu_custom_call.1} parent=5 // pred_check_branch
        %151 = sbr.rel (%p149) target = $region20
      $region19: #{tpu_custom_call.1} parent=5 // pred_region
        // Predicated region
        $region21: #{tpu_custom_call.1} parent=19 // pred_check
          %p152 = pneg %p49
        $region22: #{tpu_custom_call.1} parent=19 // pred_check_branch
          %154 = sbr.rel (%p152) target = $region24
        $region23: #{tpu_custom_call.1} parent=19 // pred_region
          %s155 = sand.u32 %s39, 1
          %s156 = scalar_lea.sflag [#allocation3], %s155
          %s157 = sand.u32 %s39, 1
          %s158 = smul.addr %s157, 32
          %s159 = scalar_lea.vmem [#allocation2], %s158
          %s160 = smul.u32 2, %s22
          %s162 = ssub.s32 512, 512
          %163 = vsyncadd %s156, %s162
          %s164 = smul.addr %s23, 2
          %s165 = smul.addr %s160, 6
          %s166 = sadd.s32 %s164, %s165
          %s167 = smul.addr %s166, 128
          %s168 = scalar_lea.hbm %s0, %s167
          %s169 = sshll.u32 %s159, 4
          %s170 = int_to_ptr.vmem [resolvable:$true] %s169
          %175 = dma.hbm_to_vmem [thread:$0]  %s168, 512, %s170, %s156, 768, 256, 16
        $region24: #{tpu_custom_call.1} parent=19 // pred_fallthru
          _
        // Predicated region
        $region25: #{tpu_custom_call.1} parent=19 // pred_check
          %p176 = pneg %p75
        $region26: #{tpu_custom_call.1} parent=19 // pred_check_branch
          %178 = sbr.rel (%p176) target = $region28
        $region27: #{tpu_custom_call.1} parent=19 // pred_region
          %p179 = scmp.lt.s32.totalorder %s23, 2
          %s180 = scalar_select %p179, %s23, 2
          %s181 = smul.addr %s180, 8
          %s182 = scalar_lea.vmem %s1, %s181
        $region28: #{tpu_custom_call.1} parent=19 // pred_fallthru
          _
      $region20: #{tpu_custom_call.1} parent=5 // pred_fallthru
        _
      %p183 = scmp.le.s32.totalorder 1, %s15
      %p184 = scmp.lt.s32.totalorder %s15, 4
      %p185 = pnand %p183, %p184
      %p186 = pneg %p185
      // Predicated region
      $region29: #{tpu_custom_call.1} parent=5 // pred_check
        _
      $region30: #{tpu_custom_call.1} parent=5 // pred_check_branch
        %188 = sbr.rel (%p185) target = $region32
      $region31: #{tpu_custom_call.1} parent=5 // pred_region
        %s189 = ssub.s32 %s15, 1
        %s190 = sand.u32 %s42, 1
        %s191 = scalar_lea.sflag [#allocation3], %s190
        %s192 = sand.u32 %s42, 1
        %s193 = smul.addr %s192, 32
        %s194 = scalar_lea.vmem [#allocation2], %s193
        // Predicated region
        $region33: #{tpu_custom_call.1} parent=31 // pred_check
          %p195 = pneg %p55
        $region34: #{tpu_custom_call.1} parent=31 // pred_check_branch
          %197 = sbr.rel (%p195) target = $region36
        $region35: #{tpu_custom_call.1} parent=31 // pred_region
          %198 = dma.done %s191, 512
        $region36: #{tpu_custom_call.1} parent=31 // pred_fallthru
          _
        %s199 = sand.u32 %s42, 1
        %s200 = scalar_lea.sflag [#allocation3], %s199
        %s201 = sand.u32 %s42, 1
        %s202 = smul.addr %s201, 32
        %s203 = scalar_lea.vmem [#allocation2], %s202
        %p204 = pneg %p55
        %p205 = pneg %p52
        %p206 = scmp.lt.s32.totalorder %s25, 2
        %s207 = scalar_select %p206, %s25, 2
        %s208 = smul.addr %s207, 8
        %s209 = scalar_lea.vmem %s1, %s208
        %p210 = pneg %p81
        %p211 = pneg %p78
        %p212 = pneg %p102
        %p213 = pneg %p99
        %p214 = pneg %p130
        %p215 = pneg %p127
        %s216 = sand.u32 %s117, 1
        %s217 = scalar_lea.sflag [#allocation4], %s216
        %s218 = sand.u32 %s117, 1
        %s219 = smul.addr %s218, 32
        %s220 = scalar_lea.vmem [#allocation5], %s219
        %s221 = smul.u32 2, %s24
        %p222 = scmp.lt.s32.totalorder %s25, 2
        %s223 = scalar_select %p222, %s25, 2
        %s224 = smul.addr %s223, 8
        %s225 = scalar_lea.vmem %s1, %s224
        %s226 = smul.u32 2, %s24
        %v227 = vld [vmem:[%s194] sm:$0xff]
        %v228 = vld [vmem:[%s194 + $0x8] sm:$0xff]
        %v229 = vld [vmem:[%s194 + $0x10] sm:$0xff]
        %v230 = vld [vmem:[%s194 + $0x18] sm:$0xff]
        %v231 = vld [vmem:[%s225] sm:$0xff]
        %v232 = vld [vmem:[%s2] sm:$0xff]
        %v233 = vld [vmem:[%s2 + $0x8] sm:$0xff]
        %v234 = vlaneseq
        %v235 = vshrl.u32 %v234, 7
        %vm236 = vcmp.eq.s32.totalorder %v235, 2
        %vm237 = vcmp.eq.s32.totalorder %v235, 3
        %vm238 = vmor %vm236, %vm237
        %v239 = vsub.f32 0.0, %v227
        %v240 = vsub.f32 0.0, %v228
        %v241 = vsub.f32 0.0, %v229
        %v242 = vsub.f32 0.0, %v230
        %v243 = vsel %vm238, 1, 0
        %vm244 = vcmp.eq.s32.totalorder %v243, 1
        %v245 = vsel %vm244, %v227, %v239
        %v246 = vsel %vm244, %v228, %v240
        %v247 = vsel %vm244, %v229, %v241
        %v248 = vsel %vm244, %v230, %v242
        %v249 = vmul.f32 %v245, 1.442695
        %v250 = vpow.pop %v249
        %v251 = vmul.f32 %v246, 1.442695
        %v252 = vpow.pop %v251
        %v253 = vmul.f32 %v247, 1.442695
        %v254 = vpow.pop %v253
        %v255 = vmul.f32 %v248, 1.442695
        %v256 = vpow.pop %v255
        %v257 = vadd.f32 %v250, 1.0
        %v258 = vadd.f32 %v252, 1.0
        %v259 = vadd.f32 %v254, 1.0
        %v260 = vadd.f32 %v256, 1.0
        %v261 = vrcp.pop %v257
        %v262 = vmul.f32 1.0, %v261
        %v263 = vrcp.pop %v258
        %v264 = vmul.f32 1.0, %v263
        %v265 = vrcp.pop %v259
        %v266 = vmul.f32 1.0, %v265
        %v267 = vrcp.pop %v260
        %v268 = vmul.f32 1.0, %v267
        %v269 = vsel %vm244, %v250, %v262
        %v270 = vsel %vm244, %v252, %v264
        %v271 = vsel %vm244, %v254, %v266
        %v272 = vsel %vm244, %v256, %v268
        %v273 = vadd.f32 %v269, %v232
        %v274 = vadd.f32 %v270, %v233
        %v275 = vadd.f32 %v271, %v232
        %v276 = vadd.f32 %v272, %v233
        %278 = vset.pattern.permute.xlu0 0
        %279 = vperm.xlu0 %278, %v231
        %v280 = vpop.permute.xlu0 %279
        %v282 = vmul.f32 %v273, %v280
        %v283 = vmul.f32 %v274, %v280
        %v284 = vmul.f32 %v275, %v280
        %v285 = vmul.f32 %v276, %v280
        %286 = vst [vmem:[%s220] sm:$0xff] %v282
        %287 = vst [vmem:[%s220 + $0x8] sm:$0xff] %v283
        %288 = vst [vmem:[%s220 + $0x10] sm:$0xff] %v284
        %289 = vst [vmem:[%s220 + $0x18] sm:$0xff] %v285
        %s290 = sand.u32 %s117, 1
        %s291 = scalar_lea.sflag [#allocation4], %s290
        %s292 = sand.u32 %s117, 1
        %s293 = smul.addr %s292, 32
        %s294 = scalar_lea.vmem [#allocation5], %s293
        // Predicated region
        $region37: #{tpu_custom_call.1} parent=31 // pred_check
          %p295 = pneg %p127
        $region38: #{tpu_custom_call.1} parent=31 // pred_check_branch
          %297 = sbr.rel (%p295) target = $region40
        $region39: #{tpu_custom_call.1} parent=31 // pred_region
          %s298 = smul.u32 2, %s24
          %s300 = ssub.s32 512, 512
          %301 = vsyncadd %s291, %s300
          %s302 = smul.addr %s25, 2
          %s303 = smul.addr %s298, 6
          %s304 = sadd.s32 %s302, %s303
          %s305 = smul.addr %s304, 128
          %s306 = scalar_lea.hbm %s3, %s305
          %s307 = sshll.u32 %s294, 4
          %s308 = int_to_ptr.vmem [resolvable:$true] %s307
          %313 = dma.vmem_to_hbm [thread:$0]  %s308, 512, %s306, %s291, 256, 768, 16
        $region40: #{tpu_custom_call.1} parent=31 // pred_fallthru
          _
      $region32: #{tpu_custom_call.1} parent=5 // pred_fallthru
        _
      %p314 = scmp.le.s32.totalorder 2, %s15
      // Predicated region
      $region41: #{tpu_custom_call.1} parent=5 // pred_check
        %p315 = pneg %p314
      $region42: #{tpu_custom_call.1} parent=5 // pred_check_branch
        %317 = sbr.rel (%p315) target = $region44
      $region43: #{tpu_custom_call.1} parent=5 // pred_region
        %s318 = ssub.s32 %s15, 2
        // Predicated region
        $region45: #{tpu_custom_call.1} parent=43 // pred_check
          %p319 = pneg %p133
        $region46: #{tpu_custom_call.1} parent=43 // pred_check_branch
          %321 = sbr.rel (%p319) target = $region48
        $region47: #{tpu_custom_call.1} parent=43 // pred_region
          %s322 = sand.u32 %s118, 1
          %s323 = scalar_lea.sflag [#allocation4], %s322
          %s324 = sand.u32 %s118, 1
          %s325 = smul.addr %s324, 32
          %s326 = scalar_lea.vmem [#allocation5], %s325
          %327 = dma.done %s323, 512
        $region48: #{tpu_custom_call.1} parent=43 // pred_fallthru
          _
      $region44: #{tpu_custom_call.1} parent=5 // pred_fallthru
        _
    $region6: #{tpu_custom_call.1} parent=1 // loop_footer
      %s19 = sadd.s32 1, %s15
    $region7: #{tpu_custom_call.1} parent=1 // loop_footer_branch
      %14 = sbr.rel target = $region3
    $region8: #{tpu_custom_call.1} parent=1 // loop_exit
      _
    %328 = vsyncpa [#allocation3], 1
    %s329 = scalar_lea.sflag [#allocation3], 1
    %330 = vsyncpa %s329, 1
    %331 = vsyncpa [#allocation4], 1
    %s332 = scalar_lea.sflag [#allocation4], 1
    %333 = vsyncpa %s332, 1

</llo_original>
